<compile_context>
chip_gen: v6e
topology: v6e:2x2x1
jax: 0.10.0
libtpu: 0.0.40
codegen_flags: <defaults>
</compile_context>

<pallas_src>
import functools
import math

import jax
import jax.numpy as jnp
from jax.experimental import pallas as pl
from jax.experimental.pallas import tpu as pltpu


def _choose_block_rows(num_rows, packed_dim):
    """Tile height in packed rows.

    Review sizing: ~2 MiB output blocks (past the point where the ~0.35 us per-step
    overhead is amortized / overlapped) and >= 8 grid steps when there is enough work,
    so each v7x TensorCore gets >= 4 balanced blocks to pipeline fill vs. writeback.
    """
    if num_rows <= 8:
        return num_rows                              # block == full array dim (legal)
    budget_bytes = 2 << 20                           # ~2 MiB per output block
    cap = max(8, (budget_bytes // (packed_dim * 4)) // 8 * 8)
    min_steps = 8                                    # >= 4 blocks per v7x TensorCore
    target = -(-num_rows // min_steps)               # ceil(num_rows / min_steps)
    target = -(-target // 8) * 8                     # round up to a multiple of 8
    return max(8, min(cap, target))


@functools.lru_cache(maxsize=None)
def _build_rope_table_fn(dim, n_freq, emb_dim, interleaved, base, inv_interp,
                         max_seq_len):
    """Returns a jitted fn: offset (int32[1]) -> rope table [max_seq_len, 1, 1, emb_dim]."""
    k = 128 // math.gcd(emb_dim, 128)                # seq positions packed per stored row
    packed_dim = k * emb_dim                         # multiple of 128 -> unmasked vst
    num_rows = pl.cdiv(max_seq_len, k)
    block_rows = _choose_block_rows(num_rows, packed_dim)
    grid = (pl.cdiv(num_rows, block_rows),)
    neg_log_scale = -(2.0 / dim) * math.log(base)    # inv_freq[j] = exp(j * neg_log_scale)
    inv_emb = 1.0 / emb_dim

    def kernel(offset_ref, out_ref):
        # --- per-column constants from a single (1, packed_dim) lane iota (tiny) ---
        c = jax.lax.broadcasted_iota(jnp.int32, (1, packed_dim), 1).astype(jnp.float32)
        # +0.5 guard makes floor robust to the ~1e-7 relative error of the f32 multiply.
        sub = jnp.floor((c + 0.5) * inv_emb)         # c // emb_dim: position within packed row
        col = c - sub * emb_dim                      # c %  emb_dim: column within rotary dim
        if interleaved:
            j = jnp.floor(col * 0.5)                 # [f0,f0,f1,f1,...]
        else:
            j = jnp.where(col < n_freq, col, col - n_freq)   # [f0..f_{h-1},f0..f_{h-1}]
        inv_freq = jnp.exp(j * neg_log_scale)        # EUP slot — idle in this write-bound kernel

        # --- sequence positions from a sublane iota + grid position ---
        r = jax.lax.broadcasted_iota(jnp.int32, (block_rows, 1), 0).astype(jnp.float32)
        row0 = (pl.program_id(0) * block_rows).astype(jnp.float32)
        off = offset_ref[0].astype(jnp.float32)
        pos = (row0 + r) * float(k) + sub + off      # exact integers in f32 (< 2^24)

        # Reference rounding order: ((pos + offset) * (1/interp)) * inv_freq.
        out_ref[...] = (pos * inv_interp) * inv_freq

    table = pl.pallas_call(
        kernel,
        out_shape=jax.ShapeDtypeStruct((num_rows, packed_dim), jnp.float32),
        grid=grid,
        in_specs=[pl.BlockSpec(memory_space=pltpu.MemorySpace.SMEM)],   # offset scalar
        out_specs=pl.BlockSpec((block_rows, packed_dim), lambda i: (i, 0)),
        compiler_params=pltpu.CompilerParams(dimension_semantics=("parallel",)),
    )

    def run(offset_arr):
        packed = table(offset_arr)
        # Packed layout is bit-identical to (seq, emb_dim) row-major: metadata reshape.
        emb2d = packed.reshape(num_rows * k, emb_dim)
        if num_rows * k != max_seq_len:
            emb2d = emb2d[:max_seq_len]              # only when max_seq_len % k != 0
        return emb2d[:, None, None, :]               # [s, 1, 1, emb_dim]

    return jax.jit(run)


class RotaryEmbedding:
    """JAX/Pallas port of megatron RotaryEmbedding (forward only)."""

    def __init__(self, kv_channels, rotary_percent, rotary_interleaved=False,
                 seq_len_interpolation_factor=None, rotary_base=10000):
        dim = kv_channels
        if rotary_percent < 1.0:
            dim = int(dim * rotary_percent)
        self.dim = dim
        self.n_freq = (dim + 1) // 2                 # len(arange(0, dim, 2))
        self.emb_dim = 2 * self.n_freq               # output rotary dim (== dim for even dim)
        self.interleaved = bool(rotary_interleaved)
        self.interp = seq_len_interpolation_factor
        self.base = rotary_base
        self.inv_interp = 1.0 if seq_len_interpolation_factor is None \
            else 1.0 / float(seq_len_interpolation_factor)

    def __call__(self, max_seq_len: int, offset: int = 0):
        fn = _build_rope_table_fn(self.dim, self.n_freq, self.emb_dim,
                                  self.interleaved, float(self.base),
                                  self.inv_interp, int(max_seq_len))
        return fn(jnp.asarray([offset], dtype=jnp.int32))


def _reference(dim, base, interleaved, interp, max_seq_len, offset):
    """Pure-JAX port of the PyTorch forward for verification."""
    inv_freq = 1.0 / base ** (jnp.arange(0, dim, 2, dtype=jnp.float32) / dim)
    seq = jnp.arange(max_seq_len, dtype=jnp.float32) + offset
    if interp is not None:
        seq = seq * (1.0 / interp)
    freqs = jnp.outer(seq, inv_freq)
    if not interleaved:
        emb = jnp.concatenate([freqs, freqs], axis=-1)
    else:
        emb = jnp.stack(
            [freqs.reshape(-1, 1), freqs.reshape(-1, 1)], axis=-1
        ).reshape(freqs.shape[0], -1)
    return emb[:, None, None, :]


if __name__ == "__main__":
    # No tensor inputs for this module; key kept for reproducibility convention.
    _ = jax.random.PRNGKey(0)

    tests = [
        # (kv_channels, rotary_percent, interleaved, interp, max_seq_len, offset)
        (32, 1.0, False, None, 8, 0),
        (32, 1.0, True,  None, 8, 0),
        (32, 1.0, False, 2.0,  8, 0),
        (32, 0.5, False, None, 37, 3),    # dim=16, k=8; ragged tail -> in-jit slice path
        (32, 1.0, True,  None, 200, 0),   # multi grid step + masked partial last block
    ]

    for kv, pct, inter, interp, seq, off in tests:
        rope = RotaryEmbedding(kv, pct, rotary_interleaved=inter,
                               seq_len_interpolation_factor=interp,
                               rotary_base=10000)
        out = jax.block_until_ready(rope(seq, offset=off))
        ref = _reference(rope.dim, rope.base, inter, interp, seq, off)

        assert out.shape == ref.shape, (out.shape, ref.shape)
        assert out.dtype == jnp.float32
        assert jnp.allclose(out, ref, atol=1e-5, rtol=1e-5), \
            f"mismatch for kv={kv} pct={pct} interleaved={inter} interp={interp}"

    print("KERNEL_OK")
</pallas_src>

<mosaic_0001>
module attributes {stable_mosaic.version = 11 : i64} {
  func.func @kernel(%arg0: i32, %arg1: memref<1xi32, #tpu.memory_space<smem>>, %arg2: memref<2x128xf32, #tpu.memory_space<vmem>>) attributes {dimension_semantics = [#tpu.dimension_semantics<parallel>], iteration_bounds = array<i64: 1>, scalar_prefetch = 0 : i64, scratch_operands = 0 : i64, tpu.core_type = #tpu.core_type<tc>, window_params = [{transform_indices = @transform_0, window_bounds = array<i64: 1>}, {transform_indices = @transform_1, window_bounds = array<i64: 2, 128>}]} {
    %0 = tpu.iota {dimensions = array<i32: 1>} : vector<1x128xi32>
    %1 = arith.sitofp %0 : vector<1x128xi32> to vector<1x128xf32>
    %cst = arith.constant 5.000000e-01 : f32
    %2 = vector.broadcast %cst : f32 to vector<1x128xf32>
    %3 = arith.addf %1, %2 : vector<1x128xf32>
    %cst_0 = arith.constant 3.125000e-02 : f32
    %4 = vector.broadcast %cst_0 : f32 to vector<1x128xf32>
    %5 = arith.mulf %3, %4 : vector<1x128xf32>
    %6 = math.floor %5 : vector<1x128xf32>
    %cst_1 = arith.constant 3.200000e+01 : f32
    %7 = vector.broadcast %cst_1 : f32 to vector<1x128xf32>
    %8 = arith.mulf %6, %7 : vector<1x128xf32>
    %9 = arith.subf %1, %8 : vector<1x128xf32>
    %cst_2 = arith.constant 1.600000e+01 : f32
    %10 = vector.broadcast %cst_2 : f32 to vector<1x128xf32>
    %11 = arith.cmpf olt, %9, %10 : vector<1x128xf32>
    %cst_3 = arith.constant 1.600000e+01 : f32
    %12 = vector.broadcast %cst_3 : f32 to vector<1x128xf32>
    %13 = arith.subf %9, %12 : vector<1x128xf32>
    %14 = arith.select %11, %9, %13 : vector<1x128xi1>, vector<1x128xf32>
    %cst_4 = arith.constant -0.575646281 : f32
    %15 = vector.broadcast %cst_4 : f32 to vector<1x128xf32>
    %16 = arith.mulf %14, %15 : vector<1x128xf32>
    %17 = math.exp %16 : vector<1x128xf32>
    %18 = tpu.iota {dimensions = array<i32: 0>} : vector<2x1xi32>
    %19 = arith.sitofp %18 : vector<2x1xi32> to vector<2x1xf32>
    %c2_i32 = arith.constant 2 : i32
    %20 = arith.muli %arg0, %c2_i32 : i32
    %21 = arith.sitofp %20 : i32 to f32
    %c0 = arith.constant 0 : index
    %22 = memref.load %arg1[%c0] : memref<1xi32, #tpu.memory_space<smem>>
    %23 = arith.sitofp %22 : i32 to f32
    %24 = vector.broadcast %21 : f32 to vector<2x1xf32>
    %25 = arith.addf %24, %19 : vector<2x1xf32>
    %cst_5 = arith.constant 4.000000e+00 : f32
    %26 = vector.broadcast %cst_5 : f32 to vector<2x1xf32>
    %27 = arith.mulf %25, %26 : vector<2x1xf32>
    %28 = vector.broadcast %27 : vector<2x1xf32> to vector<2x128xf32>
    %29 = vector.broadcast %6 : vector<1x128xf32> to vector<2x128xf32>
    %30 = arith.addf %28, %29 : vector<2x128xf32>
    %31 = vector.broadcast %23 : f32 to vector<2x128xf32>
    %32 = arith.addf %30, %31 : vector<2x128xf32>
    %cst_6 = arith.constant 1.000000e+00 : f32
    %33 = vector.broadcast %cst_6 : f32 to vector<2x128xf32>
    %34 = arith.mulf %32, %33 : vector<2x128xf32>
    %35 = vector.broadcast %17 : vector<1x128xf32> to vector<2x128xf32>
    %36 = arith.mulf %34, %35 : vector<2x128xf32>
    %c0_7 = arith.constant 0 : index
    %c0_8 = arith.constant 0 : index
    %37 = vector.load %arg2[%c0_7, %c0_8] : memref<2x128xf32, #tpu.memory_space<vmem>>, vector<2x128xf32>
    tpu.vector_store %arg2[%c0_7, %c0_8], %36 {strides = array<i32>} : memref<2x128xf32, #tpu.memory_space<vmem>>, vector<2x128xf32>,
    return
  }
  func.func @transform_0(%arg0: i32) -> i32 {
    %c0_i32 = arith.constant 0 : i32
    %c0_i32_0 = arith.constant 0 : i32
    return %c0_i32 : i32
  }
  func.func @transform_1(%arg0: i32) -> (i32, i32) {
    %c0_i32 = arith.constant 0 : i32
    %c0_i32_0 = arith.constant 0 : i32
    return %arg0, %c0_i32 : i32, i32
  }
}

</mosaic_0001>

<llo_original>
// kernel: run.1
$region0: #{run.1}
  #allocation0 [shape = 'u32[]', space=smem, size = 0x4, offset = 0x4, fixed_abs, tag = 'smem constant byte address 0x4 - core index']
  #allocation1 [shape = 'u32[144,128]{1,0:T(1,128)}', space=vmem, size = 0x12000, scoped, tag = 'internal scratch']
  #allocation2 [shape = 's32[1]{0:T(128)S(6)}', space=smem, size = 0x200, scoped, tag = 'scoped memory for run.1']
  %s0 = inlined_call_operand.<no memory space> [shape: s32[1], index: 0, kind: input, shape index: {}]
  %s1 = inlined_call_operand.vmem [shape: f32[2,128], index: 1, kind: output, shape index: {}]
  %s2 = sld [smem:[#allocation0]]
  $region14: #{run.1} parent=0
    _
  %s4 = ssub.s32 1, %s2
  %s5 = scalar_select 0, %s4, %s2
  %6 = sst [smem:[#allocation2]] %s0
  // Predicated region
  $region2: #{run.1} parent=0 // pred_check
    _
  $region3: #{run.1} parent=0 // pred_check_branch
    %8 = sbr.rel (0) target = $region5
  $region4: #{run.1} parent=0 // pred_region
    _
  $region5: #{run.1} parent=0 // pred_fallthru
    _
  %v9 = vlaneseq
  %v10 = vand.u32 %v9, 127
  %v11 = vcvt.s32.f32 %v10
  %v12 = vadd.f32 %v11, 0.5
  %v13 = vmul.f32 %v12, 0.03125
  %v14 = vfloor.f32 %v13
  %v15 = vmul.f32 %v14, 32.0
  %v16 = vsub.f32 %v11, %v15
  %vm17 = vcmp.lt.f32.partialorder %v16, 16.0
  %v18 = vsub.f32 %v16, 16.0
  %v19 = vsel %vm17, %v16, %v18
  %v20 = vmul.f32 %v19, -0.5756463
  %v21 = vmul.f32 %v20, 1.442695
  %v22 = vpow.pop %v21
  %v23 = vlaneseq
  %v24 = vshrl.u32 %v23, 7
  %v25 = vcvt.s32.f32 %v24
  %s26 = smul.u32 0, 2
  %s27 = scvt.s32.f32 %s26
  %s28 = sld [smem:[#allocation2]]
  %s29 = scvt.s32.f32 %s28
  %v30 = vstv %s27
  %v31 = vadd.f32 %v30, %v25
  %v32 = vmul.f32 %v31, 4.0
  %v33 = vadd.f32 %v32, %v14
  %v34 = vstv %s29
  %v35 = vadd.f32 %v33, %v34
  %v36 = vmul.f32 %v35, %v22
  %37 = vst [vmem:[%s1] sm:$0x3] %v36
  // Predicated region
  $region6: #{run.1} parent=0 // pred_check
    _
  $region7: #{run.1} parent=0 // pred_check_branch
    %39 = sbr.rel (0) target = $region9
  $region8: #{run.1} parent=0 // pred_region
    _
  $region9: #{run.1} parent=0 // pred_fallthru
    _
  // Predicated region
  $region10: #{run.1} parent=0 // pred_check
    _
  $region11: #{run.1} parent=0 // pred_check_branch
    %41 = sbr.rel (0) target = $region13
  $region12: #{run.1} parent=0 // pred_region
    _
  $region13: #{run.1} parent=0 // pred_fallthru
    _

</llo_original>
